<compile_context>
chip_gen: v5e
topology: v5e:2x2
jax: 0.10.0
libtpu: 0.0.40
codegen_flags: <defaults>
</compile_context>

<pallas_src>
import functools

import jax
import jax.numpy as jnp
from jax.experimental import pallas as pl
from jax.experimental.pallas import tpu as pltpu


_LANE = 128
_MIB = 1 << 20

_TM_DEFAULT = 512
_TN_DEFAULT = 512
_TK_DEFAULT = {2: 2048, 4: 1024}          # itemsize -> default reduction tile

# Budget for the weight-resident (tk = Kp) fast path: all double-buffered
# blocks + accumulator must fit under this (leaves room under v7x VMEM).
_RESIDENT_BUDGET = 32 * _MIB
_VMEM_LIMIT_CAP = 48 * _MIB

_SUPPORTED_ACTIVATIONS = (None, "relu", "tanh", "sigmoid", "gelu")


def _round_up(a, b):
    return (a + b - 1) // b * b


def _sublane(dtype):
    return 16 if jnp.dtype(dtype) == jnp.bfloat16 else 8


def _split(extent, tile_default, align):
    """Pick an `align`-multiple tile <= tile_default covering `extent` with
    minimal padding.  Returns (tile, padded_extent)."""
    ext = _round_up(extent, align)
    nblk = -(-ext // tile_default)
    tile = _round_up(-(-ext // nblk), align)
    return tile, tile * nblk


def _plan_kn(in_features, out_features, dtype, tn=None, tk=None):
    """Tiling plan for the weight dims, shared by init (padding) and forward."""
    itemsize = jnp.dtype(dtype).itemsize
    tk_def = tk or _TK_DEFAULT.get(itemsize, 1024)
    tn_def = tn or _TN_DEFAULT
    tk, Kp = _split(in_features, tk_def, _LANE)
    tn, Np = _split(out_features, tn_def, _LANE)
    return tn, tk, Kp, Np


def _apply_activation(y, activation):
    if activation is None:
        return y
    if activation == "relu":
        return jnp.maximum(y, 0.0)
    if activation == "tanh":
        return jnp.tanh(y)
    if activation == "sigmoid":
        return jax.nn.sigmoid(y)
    if activation == "gelu":
        return jax.nn.gelu(y)
    raise ValueError(f"unsupported activation: {activation!r}")


# --------------------------------------------------------------------------
# Kernels
# --------------------------------------------------------------------------
def _mlp_kernel_fused(x_ref, w_ref, b_ref, o_ref, *, activation):
    """Single reduction step (gk == 1): full-K dot, fused bias + activation."""
    y = jnp.dot(x_ref[...], w_ref[...], preferred_element_type=jnp.float32)
    y = y + b_ref[...].astype(jnp.float32)
    y = _apply_activation(y, activation)
    o_ref[...] = y.astype(o_ref.dtype)


def _mlp_kernel_acc(x_ref, w_ref, b_ref, o_ref, acc_ref, *, activation):
    """K-tiled path: persistent f32 accumulator across the innermost k axis."""
    k = pl.program_id(2)

    @pl.when(k == 0)
    def _():
        acc_ref[...] = jnp.zeros_like(acc_ref)

    acc_ref[...] += jnp.dot(
        x_ref[...], w_ref[...], preferred_element_type=jnp.float32
    )

    @pl.when(k == pl.num_programs(2) - 1)
    def _():
        y = acc_ref[...] + b_ref[...].astype(jnp.float32)
        y = _apply_activation(y, activation)
        o_ref[...] = y.astype(o_ref.dtype)


# --------------------------------------------------------------------------
# Forward wrapper
# --------------------------------------------------------------------------
def mlp_forward(x, params, activation=None, drop=0.0, *, tm=None, tn=None,
                tk=None, weight_resident=None):
    """y = act(x @ w_t + bias); dropout is identity for p=0 / inference.

    params: dict from init_mlp_params (pre-transposed, pre-padded weight).
    tn/tk overrides (if any) must match the ones used at init time.
    """
    if activation not in _SUPPORTED_ACTIVATIONS:
        raise ValueError(
            f"unsupported activation {activation!r}; "
            f"supported: {_SUPPORTED_ACTIVATIONS}"
        )
    if drop:
        # TODO(synk): training-mode dropout (p>0) not implemented in-kernel.
        raise NotImplementedError("dropout with p>0 is not implemented")

    w_p = params["w_t"]
    b_p = params["bias"]
    K = params["in_features"]
    N = params["out_features"]

    dtype = w_p.dtype
    itemsize = jnp.dtype(dtype).itemsize
    sub = _sublane(dtype)

    orig_shape = x.shape
    if x.ndim != 2:
        x = x.reshape(-1, orig_shape[-1])
    if x.dtype != dtype:
        x = x.astype(dtype)           # run the MXU in the weight dtype

    M, Kx = x.shape
    assert Kx == K, "x / weight shape mismatch"

    tn, tk, Kp, Np = _plan_kn(K, N, dtype, tn=tn, tk=tk)
    assert w_p.shape == (Kp, Np), (
        "weight not padded to the forward plan; re-run init_mlp_params with "
        "matching tn/tk")
    assert b_p.shape == (1, Np), "bias not padded to the forward plan"

    tm, Mp = _split(M, tm or _TM_DEFAULT, sub)

    # Weight-resident fast path: promote the reduction tile to the full padded
    # K so each (Kp, tn) weight panel is DMA'd from HBM exactly once per call.
    resident_bytes = (2 * tm * Kp + 2 * Kp * tn + 2 * tm * tn) * itemsize \
        + tm * tn * 4
    if weight_resident is None:
        weight_resident = resident_bytes <= _RESIDENT_BUDGET
    if weight_resident:
        tk = Kp

    gn = Np // tn
    gk = Kp // tk
    gm = Mp // tm

    # v7x has 2 TensorCores: make sure the parallel (j, i) grid has >= 2 blocks.
    if gm * gn < 2:
        tm_half = _round_up(-(-M // 2), sub)
        if sub <= tm_half < tm:
            tm = tm_half
            Mp = _round_up(M, tm)
            gm = Mp // tm

    x_p = x if (Mp == M and Kp == K) else jnp.pad(x, ((0, Mp - M), (0, Kp - K)))

    grid = (gn, gm, gk)               # j outer, i middle, k innermost

    if gk == 1:
        kernel = functools.partial(_mlp_kernel_fused, activation=activation)
        scratch = []
    else:
        kernel = functools.partial(_mlp_kernel_acc, activation=activation)
        scratch = [pltpu.VMEM((tm, tn), jnp.float32)]

    vmem_bytes = (2 * tm * tk + 2 * tk * tn + 2 * tn + 2 * tm * tn) * itemsize
    if gk > 1:
        vmem_bytes += tm * tn * 4
    vmem_limit = int(max(vmem_bytes + 2 * _MIB, 32 * _MIB))
    vmem_limit = int(min(vmem_limit, max(_VMEM_LIMIT_CAP, vmem_bytes + 2 * _MIB)))

    # Truthful streamed-byte estimate: x re-read once per j panel, weight read
    # once when resident (gk==1) / once per i block otherwise.
    w_hbm_reads = 1 if gk == 1 else gm
    trans = Mp * Np if activation in ("tanh", "sigmoid", "gelu") else 0
    cost = pl.CostEstimate(
        flops=2 * Mp * Kp * Np,
        transcendentals=trans,
        bytes_accessed=(gn * Mp * Kp + w_hbm_reads * Kp * Np + Np + Mp * Np)
        * itemsize,
    )

    out_p = pl.pallas_call(
        kernel,
        out_shape=jax.ShapeDtypeStruct((Mp, Np), dtype),
        grid_spec=pltpu.PrefetchScalarGridSpec(
            num_scalar_prefetch=0,
            grid=grid,
            in_specs=[
                pl.BlockSpec((tm, tk), lambda j, i, k: (i, k)),  # x tile
                pl.BlockSpec((tk, tn), lambda j, i, k: (k, j)),  # weight tile/panel
                pl.BlockSpec((1, tn), lambda j, i, k: (0, j)),   # bias tile
            ],
            out_specs=pl.BlockSpec((tm, tn), lambda j, i, k: (i, j)),
            scratch_shapes=scratch,
        ),
        compiler_params=pltpu.CompilerParams(
            dimension_semantics=("parallel", "parallel", "arbitrary"),
            vmem_limit_bytes=vmem_limit,
        ),
        cost_estimate=cost,
    )(x_p, w_p, b_p)

    if Mp != M or Np != N:
        out_p = out_p[:M, :N]
    if len(orig_shape) != 2:
        out_p = out_p.reshape(orig_shape[:-1] + (N,))
    return out_p


# --------------------------------------------------------------------------
# Parameter init (orthogonal weight, torch-Linear-style bias)
# --------------------------------------------------------------------------
def _orthogonal_init(key, out_features, in_features):
    """Orthogonal init matching torch.nn.init.orthogonal_ semantics."""
    rows, cols = out_features, in_features
    flat = jax.random.normal(key, (max(rows, cols), min(rows, cols)),
                             dtype=jnp.float32)
    q, r = jnp.linalg.qr(flat)
    d = jnp.sign(jnp.diagonal(r))
    q = q * d[None, :]
    if rows < cols:
        q = q.T
    return q[:rows, :cols]


def init_mlp_params(key, input_size, layer_size, dtype=jnp.float32, *,
                    tn=None, tk=None):
    """Returns params with the weight pre-transposed to (IN, OUT) and padded
    once (at init time) to the tile plan; bias stored padded as (1, Np)."""
    k_w, k_b = jax.random.split(key)
    weight = _orthogonal_init(k_w, layer_size, input_size)       # (OUT, IN) f32
    bound = 1.0 / (input_size ** 0.5)
    bias = jax.random.uniform(k_b, (layer_size,), minval=-bound, maxval=bound,
                              dtype=jnp.float32)

    _, _, Kp, Np = _plan_kn(input_size, layer_size, dtype, tn=tn, tk=tk)
    w_t = weight.T.astype(dtype)                                  # (IN, OUT)
    w_p = jnp.pad(w_t, ((0, Kp - input_size), (0, Np - layer_size)))
    b_p = jnp.pad(bias.astype(dtype).reshape(1, layer_size),
                  ((0, 0), (0, Np - layer_size)))
    return {"w_t": w_p, "bias": b_p,
            "in_features": input_size, "out_features": layer_size}


# --------------------------------------------------------------------------
if __name__ == "__main__":
    key = jax.random.PRNGKey(0)
    k_x, k_p, k_x2, k_p2 = jax.random.split(key, 4)

    # --- Test 1: module-default small shapes (weight-resident, gk == 1) -----
    batch, input_size, layer_size = 8, 32, 32
    x = jax.random.normal(k_x, (batch, input_size), dtype=jnp.float32)
    params = init_mlp_params(k_p, input_size, layer_size)

    y_none = mlp_forward(x, params, activation=None)
    y_relu = mlp_forward(x, params, activation="relu")
    jax.block_until_ready((y_none, y_relu))

    w_log = params["w_t"][:input_size, :layer_size]
    b_log = params["bias"][0, :layer_size]
    ref = x @ w_log + b_log
    assert y_none.shape == (batch, layer_size)
    assert jnp.allclose(y_none, ref, atol=1e-5), "linear mismatch"
    assert jnp.allclose(y_relu, jnp.maximum(ref, 0.0), atol=1e-5), "relu mismatch"

    # --- Test 2: ragged shapes, multi-block grid, both code paths -----------
    batch2, in2, out2 = 100, 384, 300
    x2 = jax.random.normal(k_x2, (batch2, in2), dtype=jnp.float32)
    params2 = init_mlp_params(k_p2, in2, out2, tn=128, tk=128)
    w2 = params2["w_t"][:in2, :out2]
    b2 = params2["bias"][0, :out2]
    ref2 = jnp.maximum(x2 @ w2 + b2, 0.0)

    # auto: weight-resident fused path (tk promoted to full padded K)
    y2_res = mlp_forward(x2, params2, activation="relu",
                         tm=64, tn=128, tk=128)
    # forced streamed path: exercises the k-tiled f32 accumulator kernel
    y2_str = mlp_forward(x2, params2, activation="relu",
                         tm=64, tn=128, tk=128, weight_resident=False)
    jax.block_until_ready((y2_res, y2_str))

    assert y2_res.shape == (batch2, out2)
    assert jnp.allclose(y2_res, ref2, atol=1e-4), "resident-path mismatch"
    assert jnp.allclose(y2_str, ref2, atol=1e-4), "streamed-path mismatch"

    print("KERNEL_OK")
</pallas_src>

<mosaic_0001>
module attributes {stable_mosaic.version = 11 : i64} {
  func.func @_mlp_kernel_fused(%arg0: i32, %arg1: i32, %arg2: i32, %arg3: memref<8x128xf32, #tpu.memory_space<vmem>>, %arg4: memref<128x128xf32, #tpu.memory_space<vmem>>, %arg5: memref<1x128xf32, #tpu.memory_space<vmem>>, %arg6: memref<8x128xf32, #tpu.memory_space<vmem>>) attributes {dimension_semantics = [#tpu.dimension_semantics<parallel>, #tpu.dimension_semantics<parallel>, #tpu.dimension_semantics<arbitrary>], iteration_bounds = array<i64: 1, 1, 1>, scalar_prefetch = 0 : i64, scratch_operands = 0 : i64, tpu.core_type = #tpu.core_type<tc>, window_params = [{transform_indices = @transform_0, window_bounds = array<i64: 8, 128>}, {transform_indices = @transform_1, window_bounds = array<i64: 128, 128>}, {transform_indices = @transform_2, window_bounds = array<i64: 1, 128>}, {transform_indices = @transform_3, window_bounds = array<i64: 8, 128>}]} {
    %c0 = arith.constant 0 : index
    %c0_0 = arith.constant 0 : index
    %0 = vector.load %arg3[%c0, %c0_0] : memref<8x128xf32, #tpu.memory_space<vmem>>, vector<8x128xf32>
    %c0_1 = arith.constant 0 : index
    %c0_2 = arith.constant 0 : index
    %1 = vector.load %arg4[%c0_1, %c0_2] : memref<128x128xf32, #tpu.memory_space<vmem>>, vector<128x128xf32>
    %cst = arith.constant dense<0.000000e+00> : vector<8x128xf32>
    %2 = tpu.matmul %0, %1, %cst {dimension_numbers = #tpu.dot_dimension_numbers<[1], [0], [0], [1], [0, 0, 1, 1], [], []>} : vector<8x128xf32>, vector<128x128xf32>, vector<8x128xf32> -> vector<8x128xf32>
    %c0_3 = arith.constant 0 : index
    %c0_4 = arith.constant 0 : index
    %3 = vector.load %arg5[%c0_3, %c0_4] : memref<1x128xf32, #tpu.memory_space<vmem>>, vector<1x128xf32>
    %4 = vector.broadcast %3 : vector<1x128xf32> to vector<8x128xf32>
    %5 = arith.addf %2, %4 : vector<8x128xf32>
    %c0_5 = arith.constant 0 : index
    %c0_6 = arith.constant 0 : index
    %6 = vector.load %arg6[%c0_5, %c0_6] : memref<8x128xf32, #tpu.memory_space<vmem>>, vector<8x128xf32>
    tpu.vector_store %arg6[%c0_5, %c0_6], %5 {strides = array<i32>} : memref<8x128xf32, #tpu.memory_space<vmem>>, vector<8x128xf32>,
    return
  }
  func.func @transform_0(%arg0: i32, %arg1: i32, %arg2: i32) -> (i32, i32) {
    %c0_i32 = arith.constant 0 : i32
    return %arg1, %arg2 : i32, i32
  }
  func.func @transform_1(%arg0: i32, %arg1: i32, %arg2: i32) -> (i32, i32) {
    %c0_i32 = arith.constant 0 : i32
    return %arg2, %arg0 : i32, i32
  }
  func.func @transform_2(%arg0: i32, %arg1: i32, %arg2: i32) -> (i32, i32) {
    %c0_i32 = arith.constant 0 : i32
    %c0_i32_0 = arith.constant 0 : i32
    return %c0_i32, %arg0 : i32, i32
  }
  func.func @transform_3(%arg0: i32, %arg1: i32, %arg2: i32) -> (i32, i32) {
    %c0_i32 = arith.constant 0 : i32
    return %arg1, %arg0 : i32, i32
  }
}

</mosaic_0001>

<llo_original>
// kernel: tpu_custom_call.1
$region0: #{tpu_custom_call.1}
  #allocation0 [shape = 'u32[]', space=smem, size = 0x4, offset = 0x4, fixed_abs, tag = 'smem constant byte address 0x4 - core index']
  #allocation1 [shape = 'u32[72,128]{1,0:T(1,128)}', space=vmem, size = 0x9000, scoped, tag = 'internal scratch']
  %s0 = inlined_call_operand.hbm [shape: f32[8,128], index: 0, kind: input, shape index: {}]
  %s1 = inlined_call_operand.hbm [shape: f32[128,128], index: 1, kind: input, shape index: {}]
  %s2 = inlined_call_operand.vmem [shape: f32[1,128], index: 2, kind: input, shape index: {}]
  %s3 = inlined_call_operand.hbm [shape: f32[8,128], index: 3, kind: output, shape index: {}]
  %s4 = sld [smem:[#allocation0]]
  $region30: #{tpu_custom_call.1} parent=0
    _
  %s6 = ssub.s32 1, %s4
  %s7 = scalar_select 0, %s6, %s4
  $region1: #{tpu_custom_call.1} parent=0
    #allocation2 [shape = 'u8[4096]{0}', space=vmem, size = 0x1000, scoped, tag = 'input window, operand 0, single buffered']
    #allocation3 [shape = 's32[1]{0}', space=sflag, size = 0x4, scoped, tag = 'scoped memory for tpu_custom_call.1']
    #allocation4 [shape = 's32[1]{0}', space=sflag, size = 0x4, scoped, tag = 'scoped memory for tpu_custom_call.1']
    #allocation5 [shape = 'u8[65536]{0}', space=vmem, size = 0x10000, scoped, tag = 'input window, operand 1, single buffered']
    #allocation6 [shape = 's32[1]{0}', space=sflag, size = 0x4, scoped, tag = 'scoped memory for tpu_custom_call.1']
    #allocation7 [shape = 'u8[4096]{0}', space=vmem, size = 0x1000, scoped, tag = 'output window, operand 0, single buffered']
    %8 = vsyncpa [#allocation3], 0
    %9 = vsyncpa [#allocation6], 0
    %10 = vsyncpa [#allocation4], 0
    // Predicated region
    $region2: #{tpu_custom_call.1} parent=1 // pred_check
      _
    $region3: #{tpu_custom_call.1} parent=1 // pred_check_branch
      %12 = sbr.rel (0) target = $region5
    $region4: #{tpu_custom_call.1} parent=1 // pred_region
      %14 = vsyncadd [#allocation3], 0
      %s16 = sshll.u32 %s0, 4
      %s17 = int_to_ptr.hbm [resolvable:$true] %s16
      %s18 = sshll.u32 [#allocation2], 4
      %s19 = int_to_ptr.vmem [resolvable:$true] %s18
      %21 = dma.hbm_to_vmem [thread:$0]  %s17, 128, %s19, [#allocation3]
    $region5: #{tpu_custom_call.1} parent=1 // pred_fallthru
      _
    // Predicated region
    $region6: #{tpu_custom_call.1} parent=1 // pred_check
      _
    $region7: #{tpu_custom_call.1} parent=1 // pred_check_branch
      %23 = sbr.rel (0) target = $region9
    $region8: #{tpu_custom_call.1} parent=1 // pred_region
      %25 = vsyncadd [#allocation6], 0
      %s26 = sshll.u32 %s1, 4
      %s27 = int_to_ptr.hbm [resolvable:$true] %s26
      %s28 = sshll.u32 [#allocation5], 4
      %s29 = int_to_ptr.vmem [resolvable:$true] %s28
      %34 = dma.hbm_to_vmem [thread:$0]  %s27, 2048, %s29, [#allocation6], 128, 128, 8
    $region9: #{tpu_custom_call.1} parent=1 // pred_fallthru
      _
    // Predicated region
    $region10: #{tpu_custom_call.1} parent=1 // pred_check
      _
    $region11: #{tpu_custom_call.1} parent=1 // pred_check_branch
      %36 = sbr.rel (0) target = $region13
    $region12: #{tpu_custom_call.1} parent=1 // pred_region
      _
    $region13: #{tpu_custom_call.1} parent=1 // pred_fallthru
      _
    // Predicated region
    $region14: #{tpu_custom_call.1} parent=1 // pred_check
      _
    $region15: #{tpu_custom_call.1} parent=1 // pred_check_branch
      %38 = sbr.rel (0) target = $region17
    $region16: #{tpu_custom_call.1} parent=1 // pred_region
      %40 = dma.done [#allocation3], 128
    $region17: #{tpu_custom_call.1} parent=1 // pred_fallthru
      _
    // Predicated region
    $region18: #{tpu_custom_call.1} parent=1 // pred_check
      _
    $region19: #{tpu_custom_call.1} parent=1 // pred_check_branch
      %42 = sbr.rel (0) target = $region21
    $region20: #{tpu_custom_call.1} parent=1 // pred_region
      %44 = dma.done [#allocation6], 2048
    $region21: #{tpu_custom_call.1} parent=1 // pred_fallthru
      _
    %v45 = vld [vmem:[#allocation2] sm:$0xff]
    %v46 = vld [vmem:[#allocation5] sm:$0xff]
    %v47 = vld [vmem:[#allocation5 + $0x8] sm:$0xff]
    %v48 = vld [vmem:[#allocation5 + $0x10] sm:$0xff]
    %v49 = vld [vmem:[#allocation5 + $0x18] sm:$0xff]
    %v50 = vld [vmem:[#allocation5 + $0x20] sm:$0xff]
    %v51 = vld [vmem:[#allocation5 + $0x28] sm:$0xff]
    %v52 = vld [vmem:[#allocation5 + $0x30] sm:$0xff]
    %v53 = vld [vmem:[#allocation5 + $0x38] sm:$0xff]
    %v54 = vld [vmem:[#allocation5 + $0x40] sm:$0xff]
    %v55 = vld [vmem:[#allocation5 + $0x48] sm:$0xff]
    %v56 = vld [vmem:[#allocation5 + $0x50] sm:$0xff]
    %v57 = vld [vmem:[#allocation5 + $0x58] sm:$0xff]
    %v58 = vld [vmem:[#allocation5 + $0x60] sm:$0xff]
    %v59 = vld [vmem:[#allocation5 + $0x68] sm:$0xff]
    %v60 = vld [vmem:[#allocation5 + $0x70] sm:$0xff]
    %v61 = vld [vmem:[#allocation5 + $0x78] sm:$0xff]
    %v62 = vld [vmem:[%s2] sm:$0x1]
    %v64 = vperm.slane %v62, 0
    %66 = vmatpush.msra.mxu0 %v61
    %67 = vmatpush.msra.mxu0 %v60
    %68 = vmatpush.msra.mxu0 %v59
    %69 = vmatpush.msra.mxu0 %v58
    %70 = vmatpush.msra.mxu0 %v57
    %71 = vmatpush.msra.mxu0 %v56
    %72 = vmatpush.msra.mxu0 %v55
    %73 = vmatpush.msra.mxu0 %v54
    %74 = vmatpush.msra.mxu0 %v53
    %75 = vmatpush.msra.mxu0 %v52
    %76 = vmatpush.msra.mxu0 %v51
    %77 = vmatpush.msra.mxu0 %v50
    %78 = vmatpush.msra.mxu0 %v49
    %79 = vmatpush.msra.mxu0 %v48
    %80 = vmatpush.msra.mxu0 %v47
    %81 = vmatpush.msra.mxu0 %v46
    %82 = vmatmul.f32.gmra.mxu0 %v45
    %v83 = vpop.f32.mrf.mxu0
    %v84 = vadd.f32 %v64, %v83
    %85 = vdwg.mxu0
    %86 = vst [vmem:[#allocation7] sm:$0xff] %v84
    // Predicated region
    $region22: #{tpu_custom_call.1} parent=1 // pred_check
      _
    $region23: #{tpu_custom_call.1} parent=1 // pred_check_branch
      %88 = sbr.rel (0) target = $region25
    $region24: #{tpu_custom_call.1} parent=1 // pred_region
      %90 = vsyncadd [#allocation4], 0
      %s92 = sshll.u32 [#allocation7], 4
      %s93 = int_to_ptr.vmem [resolvable:$true] %s92
      %s94 = sshll.u32 %s3, 4
      %s95 = int_to_ptr.hbm [resolvable:$true] %s94
      %97 = dma.vmem_to_hbm [thread:$0]  %s93, 128, %s95, [#allocation4]
    $region25: #{tpu_custom_call.1} parent=1 // pred_fallthru
      _
    // Predicated region
    $region26: #{tpu_custom_call.1} parent=1 // pred_check
      _
    $region27: #{tpu_custom_call.1} parent=1 // pred_check_branch
      %99 = sbr.rel (0) target = $region29
    $region28: #{tpu_custom_call.1} parent=1 // pred_region
      %101 = dma.done [#allocation4], 128
    $region29: #{tpu_custom_call.1} parent=1 // pred_fallthru
      _
    %102 = vsyncpa [#allocation3], 1
    %103 = vsyncpa [#allocation6], 1
    %104 = vsyncpa [#allocation4], 1

</llo_original>
